<compile_context>
chip_gen: v6e
topology: v6e:2x2x1
jax: 0.10.0
libtpu: 0.0.40
codegen_flags: <defaults>
</compile_context>

<pallas_src>
import jax
import jax.numpy as jnp
import numpy as np
from jax.experimental import pallas as pl
from jax.experimental.pallas import tpu as pltpu


# TODO(synk): ctlib.projection / projection_t (exact fan-beam ray tracing with dAng,
# s2r, d2r, binshift) have no Pallas equivalent; replaced by a deterministic
# parallel-beam system matrix so projection = A @ x and projection_t = A^T @ s.
def build_system_matrix(views, dets, H, W, dImg, dDet):
    """Deterministic parallel-beam system matrix, shape [views*dets, H*W], f32."""
    angles = np.arange(views, dtype=np.float64) * (np.pi / views)
    xs = (np.arange(W, dtype=np.float64) - (W - 1) / 2.0) * dImg
    ys = (np.arange(H, dtype=np.float64) - (H - 1) / 2.0) * dImg
    det_pos = (np.arange(dets, dtype=np.float64) - (dets - 1) / 2.0) * dDet

    X, Y = np.meshgrid(xs, ys)                       # [H, W]
    A = np.zeros((views * dets, H * W), dtype=np.float64)
    for v, th in enumerate(angles):
        t = X * np.cos(th) + Y * np.sin(th)          # [H, W] projected coord
        dist = np.abs(t.reshape(1, H * W) - det_pos.reshape(dets, 1))  # [dets, H*W]
        w = np.maximum(0.0, 1.0 - dist / dDet) * dImg
        A[v * dets:(v + 1) * dets, :] = w
    return jnp.asarray(A, dtype=jnp.float32)


def fidelity_kernel(w_ref, x_ref, proj_ref, a_ref, out_ref, acc_ref):
    """Single-pass fused fidelity step.

    Grid axis 0 tiles the sinogram dimension P (a reduction into acc_ref).
      w_ref:    [1]        f32, SMEM (scalar weight)
      x_ref:    [Bp, N]    f32, resident across grid
      proj_ref: [Bp, tp]   f32, tile of the measured sinogram
      a_ref:    [tp, N]    bf16, tile of the system matrix (stored layout, no .T)
      out_ref:  [Bp, N]    resident output, written at last step
      acc_ref:  [Bp, N]    f32 VMEM scratch back-projection accumulator
    """
    p = pl.program_id(0)

    @pl.when(p == 0)
    def _():
        acc_ref[...] = jnp.zeros_like(acc_ref)

    x = x_ref[...]                                   # [Bp, N] f32 (VMEM resident)
    a = a_ref[...]                                   # [tp, N] bf16

    # forward projection block: contract over N, A consumed in stored [tp, N] layout.
    sino = jax.lax.dot_general(
        x.astype(jnp.bfloat16), a,
        dimension_numbers=(((1,), (1,)), ((), ())),
        preferred_element_type=jnp.float32)          # [Bp, tp]

    temp = sino - proj_ref[...].astype(jnp.float32)  # [Bp, tp]

    # back projection accumulate: [Bp, tp] @ [tp, N] -> [Bp, N] (f32 accumulation)
    acc_ref[...] += jnp.dot(temp.astype(jnp.bfloat16), a,
                            preferred_element_type=jnp.float32)

    @pl.when(p == pl.num_programs(0) - 1)
    def _():
        w = w_ref[0]
        out_ref[...] = (x - w * acc_ref[...]).astype(out_ref.dtype)


def _round_up(v, m):
    return ((v + m - 1) // m) * m


def _pick_sino_tile(P, N, a_bytes=2, budget_bytes=12 * 1024 * 1024):
    """Largest 128-multiple tile of P whose double-buffered A tile fits the budget."""
    tp = (budget_bytes // max(1, N * a_bytes)) // 128 * 128
    tp = max(128, min(tp, 1024))
    tp = min(tp, _round_up(P, 128))
    return tp


def fidelity_module_forward(input_data, proj, A, weight, *, tp=None):
    """input_data: [B, 1, H, W], proj: [B, 1, views, dets] (NCHW, like PyTorch)."""
    B, C, H, W = input_data.shape
    _, _, views, dets = proj.shape
    N = H * W
    P = views * dets
    BC = B * C

    # sublane-pad batch rows to a multiple of 8 -> full-width vreg loads/stores
    Bp = max(8, _round_up(BC, 8))

    if tp is None:
        tp = _pick_sino_tile(P, N)
    Pp = _round_up(P, tp)                            # pad sinogram dim to tile multiple

    x_flat = input_data.reshape(BC, N).astype(jnp.float32)
    p_flat = proj.reshape(BC, P).astype(jnp.float32)

    x_pad = jnp.zeros((Bp, N), jnp.float32).at[:BC].set(x_flat)
    p_pad = jnp.zeros((Bp, Pp), jnp.float32).at[:BC, :P].set(p_flat)
    # stream the big operand (A) in bf16; zero-padded rows contribute nothing.
    a_bf16 = jnp.zeros((Pp, N), jnp.bfloat16).at[:P].set(A.astype(jnp.bfloat16))

    w_arr = jnp.reshape(weight, (1,)).astype(jnp.float32)

    grid = (Pp // tp,)
    flops = 4 * Bp * Pp * N                          # two matmuls
    bytes_accessed = Pp * N * 2 + Bp * N * 4 * 2 + Bp * Pp * 4

    out_pad = pl.pallas_call(
        fidelity_kernel,
        out_shape=jax.ShapeDtypeStruct((Bp, N), input_data.dtype),
        grid_spec=pltpu.PrefetchScalarGridSpec(
            num_scalar_prefetch=0,
            grid=grid,
            in_specs=[
                pl.BlockSpec(memory_space=pltpu.SMEM),        # weight scalar
                pl.BlockSpec((Bp, N), lambda p: (0, 0)),       # x (resident)
                pl.BlockSpec((Bp, tp), lambda p: (0, p)),      # proj tile
                pl.BlockSpec((tp, N), lambda p: (p, 0)),       # A tile (bf16)
            ],
            out_specs=pl.BlockSpec((Bp, N), lambda p: (0, 0)),  # resident output
            scratch_shapes=[pltpu.VMEM((Bp, N), jnp.float32)],  # back-proj accumulator
        ),
        compiler_params=pltpu.CompilerParams(
            dimension_semantics=("arbitrary",),                 # P axis is a reduction
            vmem_limit_bytes=64 * 1024 * 1024,
        ),
        cost_estimate=pl.CostEstimate(
            flops=flops, transcendentals=0, bytes_accessed=bytes_accessed),
    )(w_arr, x_pad, p_pad, a_bf16)

    return out_pad[:BC].reshape(B, C, H, W)


# TODO(synk): Iter_block's other branches (Conv2d stack, VSSBlock -- definition not
# provided in the spec -- and Im2Patch/Patch2Im) are outside the scope of this
# fidelity kernel and are not implemented here.


if __name__ == "__main__":
    # geometry "options": views, dets, H, W, dImg, dDet (small synthetic sizes)
    views, dets = 16, 32
    B, C, H, W = 2, 1, 16, 16
    dImg, dDet = 1.0, 1.0

    A = build_system_matrix(views, dets, H, W, dImg, dDet)

    key = jax.random.PRNGKey(0)
    k1, k2 = jax.random.split(key)
    input_data = jax.random.normal(k1, (B, C, H, W), dtype=jnp.float32)
    proj = jax.random.normal(k2, (B, C, views, dets), dtype=jnp.float32)

    # deterministic init of the learnable scalar weight (torch.Tensor(1).squeeze())
    weight = jnp.float32(0.1)

    # tp=128 -> 4 grid steps over P=512: exercises the pipelined accumulator path.
    out = fidelity_module_forward(input_data, proj, A, weight, tp=128)
    out = jax.block_until_ready(out)

    # pure-JAX reference using the same bf16 quantization of A / the matmul inputs
    # (accumulation in f32), so the check isolates kernel correctness.
    x_flat = input_data.reshape(B * C, H * W)
    p_flat = proj.reshape(B * C, views * dets)
    Ab = A.astype(jnp.bfloat16).astype(jnp.float32)
    xb = x_flat.astype(jnp.bfloat16).astype(jnp.float32)
    sino = xb @ Ab.T
    temp = sino - p_flat
    back = temp.astype(jnp.bfloat16).astype(jnp.float32) @ Ab
    ref = (x_flat - weight * back).reshape(B, C, H, W)

    assert out.shape == ref.shape, f"shape mismatch {out.shape} vs {ref.shape}"
    assert jnp.allclose(out, ref, atol=1e-2, rtol=1e-2), (
        "mismatch vs reference, max abs diff = "
        f"{float(jnp.max(jnp.abs(out - ref)))}")

    print("KERNEL_OK")
</pallas_src>

<mosaic_0001>
module attributes {stable_mosaic.version = 11 : i64} {
  func.func @fidelity_kernel(%arg0: i32, %arg1: memref<1xf32, #tpu.memory_space<smem>>, %arg2: memref<8x256xf32, #tpu.memory_space<vmem>>, %arg3: memref<8x128xf32, #tpu.memory_space<vmem>>, %arg4: memref<128x256xbf16, #tpu.memory_space<vmem>>, %arg5: memref<8x256xf32, #tpu.memory_space<vmem>>, %arg6: memref<8x256xf32, #tpu.memory_space<vmem>>) attributes {dimension_semantics = [#tpu.dimension_semantics<arbitrary>], iteration_bounds = array<i64: 4>, scalar_prefetch = 0 : i64, scratch_operands = 1 : i64, tpu.core_type = #tpu.core_type<tc>, window_params = [{transform_indices = @transform_0, window_bounds = array<i64: 1>}, {pipeline_mode = #tpu.pipeline_mode<synchronous>, transform_indices = @transform_1, window_bounds = array<i64: 8, 256>}, {transform_indices = @transform_2, window_bounds = array<i64: 8, 128>}, {transform_indices = @transform_3, window_bounds = array<i64: 128, 256>}, {pipeline_mode = #tpu.pipeline_mode<synchronous>, transform_indices = @transform_4, window_bounds = array<i64: 8, 256>}]} {
    %c0_i32 = arith.constant 0 : i32
    %0 = arith.cmpi eq, %arg0, %c0_i32 : i32
    %1 = arith.extui %0 : i1 to i32
    %c0_i32_0 = arith.constant 0 : i32
    %2 = arith.cmpi ne, %1, %c0_i32_0 : i32
    scf.if %2 {
      %cst_12 = arith.constant 0.000000e+00 : f32
      %17 = vector.broadcast %cst_12 : f32 to vector<8x256xf32>
      %c0_13 = arith.constant 0 : index
      %c0_14 = arith.constant 0 : index
      %18 = vector.load %arg6[%c0_13, %c0_14] : memref<8x256xf32, #tpu.memory_space<vmem>>, vector<8x256xf32>
      tpu.vector_store %arg6[%c0_13, %c0_14], %17 {strides = array<i32>} : memref<8x256xf32, #tpu.memory_space<vmem>>, vector<8x256xf32>,
    } else {
    }
    %c0 = arith.constant 0 : index
    %c0_1 = arith.constant 0 : index
    %3 = vector.load %arg2[%c0, %c0_1] : memref<8x256xf32, #tpu.memory_space<vmem>>, vector<8x256xf32>
    %c0_2 = arith.constant 0 : index
    %c0_3 = arith.constant 0 : index
    %4 = vector.load %arg4[%c0_2, %c0_3] : memref<128x256xbf16, #tpu.memory_space<vmem>>, vector<128x256xbf16>
    %5 = arith.truncf %3 : vector<8x256xf32> to vector<8x256xbf16>
    %cst = arith.constant dense<0.000000e+00> : vector<8x128xf32>
    %6 = tpu.matmul %5, %4, %cst {dimension_numbers = #tpu.dot_dimension_numbers<[1], [1], [0], [0], [0, 0, 1, 0], [], []>} : vector<8x256xbf16>, vector<128x256xbf16>, vector<8x128xf32> -> vector<8x128xf32>
    %c0_4 = arith.constant 0 : index
    %c0_5 = arith.constant 0 : index
    %7 = vector.load %arg3[%c0_4, %c0_5] : memref<8x128xf32, #tpu.memory_space<vmem>>, vector<8x128xf32>
    %8 = arith.subf %6, %7 : vector<8x128xf32>
    %c0_6 = arith.constant 0 : index
    %c0_7 = arith.constant 0 : index
    %9 = vector.load %arg6[%c0_6, %c0_7] : memref<8x256xf32, #tpu.memory_space<vmem>>, vector<8x256xf32>
    %10 = arith.truncf %8 : vector<8x128xf32> to vector<8x128xbf16>
    %cst_8 = arith.constant dense<0.000000e+00> : vector<8x256xf32>
    %11 = tpu.matmul %10, %4, %cst_8 {dimension_numbers = #tpu.dot_dimension_numbers<[1], [0], [0], [1], [0, 0, 1, 1], [], []>} : vector<8x128xbf16>, vector<128x256xbf16>, vector<8x256xf32> -> vector<8x256xf32>
    %12 = arith.addf %9, %11 : vector<8x256xf32>
    %c0_9 = arith.constant 0 : index
    %c0_10 = arith.constant 0 : index
    %13 = vector.load %arg6[%c0_9, %c0_10] : memref<8x256xf32, #tpu.memory_space<vmem>>, vector<8x256xf32>
    tpu.vector_store %arg6[%c0_9, %c0_10], %12 {strides = array<i32>} : memref<8x256xf32, #tpu.memory_space<vmem>>, vector<8x256xf32>,
    %c3_i32 = arith.constant 3 : i32
    %14 = arith.cmpi eq, %arg0, %c3_i32 : i32
    %15 = arith.extui %14 : i1 to i32
    %c0_i32_11 = arith.constant 0 : i32
    %16 = arith.cmpi ne, %15, %c0_i32_11 : i32
    scf.if %16 {
      %c0_12 = arith.constant 0 : index
      %17 = memref.load %arg1[%c0_12] : memref<1xf32, #tpu.memory_space<smem>>
      %c0_13 = arith.constant 0 : index
      %c0_14 = arith.constant 0 : index
      %18 = vector.load %arg6[%c0_13, %c0_14] : memref<8x256xf32, #tpu.memory_space<vmem>>, vector<8x256xf32>
      %19 = vector.broadcast %17 : f32 to vector<8x256xf32>
      %20 = arith.mulf %19, %18 : vector<8x256xf32>
      %21 = arith.subf %3, %20 : vector<8x256xf32>
      %c0_15 = arith.constant 0 : index
      %c0_16 = arith.constant 0 : index
      %22 = vector.load %arg5[%c0_15, %c0_16] : memref<8x256xf32, #tpu.memory_space<vmem>>, vector<8x256xf32>
      tpu.vector_store %arg5[%c0_15, %c0_16], %21 {strides = array<i32>} : memref<8x256xf32, #tpu.memory_space<vmem>>, vector<8x256xf32>,
    } else {
    }
    return
  }
  func.func @transform_0(%arg0: i32) -> i32 {
    %c0_i32 = arith.constant 0 : i32
    %c0_i32_0 = arith.constant 0 : i32
    return %c0_i32 : i32
  }
  func.func @transform_1(%arg0: i32) -> (i32, i32) {
    %c0_i32 = arith.constant 0 : i32
    %c0_i32_0 = arith.constant 0 : i32
    %c0_i32_1 = arith.constant 0 : i32
    return %c0_i32, %c0_i32_0 : i32, i32
  }
  func.func @transform_2(%arg0: i32) -> (i32, i32) {
    %c0_i32 = arith.constant 0 : i32
    %c0_i32_0 = arith.constant 0 : i32
    return %c0_i32, %arg0 : i32, i32
  }
  func.func @transform_3(%arg0: i32) -> (i32, i32) {
    %c0_i32 = arith.constant 0 : i32
    %c0_i32_0 = arith.constant 0 : i32
    return %arg0, %c0_i32 : i32, i32
  }
  func.func @transform_4(%arg0: i32) -> (i32, i32) {
    %c0_i32 = arith.constant 0 : i32
    %c0_i32_0 = arith.constant 0 : i32
    %c0_i32_1 = arith.constant 0 : i32
    return %c0_i32, %c0_i32_0 : i32, i32
  }
}

</mosaic_0001>

<llo_original>
// kernel: tpu_custom_call.1
$region0: #{tpu_custom_call.1}
  #allocation0 [shape = 'u32[]', space=smem, size = 0x4, offset = 0x4, fixed_abs, tag = 'smem constant byte address 0x4 - core index']
  #allocation1 [shape = 'u32[144,128]{1,0:T(1,128)}', space=vmem, size = 0x12000, scoped, tag = 'internal scratch']
  #allocation2 [shape = 'f32[8,256]{1,0:T(8,128)}', space=vmem, size = 0x2000, scoped, tag = 'scratch operand']
  #allocation3 [shape = 'f32[1]{0:T(128)S(6)}', space=smem, size = 0x200, scoped, tag = 'scoped memory for tpu_custom_call.1']
  %s0 = inlined_call_operand.<no memory space> [shape: f32[1], index: 0, kind: input, shape index: {}]
  %s1 = inlined_call_operand.hbm [shape: f32[8,256], index: 1, kind: input, shape index: {}]
  %s2 = inlined_call_operand.hbm [shape: f32[8,512], index: 2, kind: input, shape index: {}]
  %s3 = inlined_call_operand.hbm [shape: bf16[512,256], index: 3, kind: input, shape index: {}]
  %s4 = inlined_call_operand.hbm [shape: f32[8,256], index: 4, kind: output, shape index: {}]
  %s5 = sld [smem:[#allocation0]]
  $region69: #{tpu_custom_call.1} parent=0
    _
  %s7 = ssub.s32 1, %s5
  %s8 = scalar_select 0, %s7, %s5
  %9 = sst [smem:[#allocation3]] %s0
  $region1: #{tpu_custom_call.1} parent=0
    #allocation4 [shape = 'u8[8192]{0}', space=vmem, size = 0x2000, scoped, tag = 'input window, operand 1, single buffered']
    #allocation5 [shape = 's32[2]{0}', space=sflag, size = 0x8, scoped, tag = 'scoped memory for tpu_custom_call.1']
    #allocation6 [shape = 's32[2]{0}', space=sflag, size = 0x8, scoped, tag = 'scoped memory for tpu_custom_call.1']
    #allocation7 [shape = 'u8[8192]{0}', space=vmem, size = 0x2000, scoped, tag = 'input window, operand 2']
    #allocation8 [shape = 's32[2]{0}', space=sflag, size = 0x8, scoped, tag = 'scoped memory for tpu_custom_call.1']
    #allocation9 [shape = 'u8[131072]{0}', space=vmem, size = 0x20000, scoped, tag = 'input window, operand 3']
    #allocation10 [shape = 'u8[8192]{0}', space=vmem, size = 0x2000, scoped, tag = 'output window, operand 0, single buffered']
    %10 = vsyncpa [#allocation5], 0
    %11 = vsyncpa [#allocation8], 0
    %s12 = scalar_lea.sflag [#allocation8], 1
    %13 = vsyncpa %s12, 0
    %14 = vsyncpa [#allocation6], 0
    loop: start=0, step=1, limit=6
    $region2: #{tpu_custom_call.1} parent=1 // loop_pre_header
      _
    $region3: #{tpu_custom_call.1} parent=1 // loop_header
      %s16 = sphi 0, %s20
      %p17 = scmp.ge.s32.totalorder %s16, 6
      %s24 = sphi 0, %s24
      %s26 = sphi 0, %s24
      %s27 = sphi 0, %s26
      %s41 = sphi 0, %s27
      %s45 = sphi 0, %s45
      %s47 = sphi 0, %s45
      %s48 = sphi 0, %s47
      %s62 = sphi 0, %s48
      %s68 = sphi 0, %s70
      %s71 = sphi 0, %s68
      %s72 = sphi 0, %s71
      %s88 = sphi 0, %s72
      %s94 = sphi 0, %s96
      %s97 = sphi 0, %s94
      %s98 = sphi 0, %s97
      %s114 = sphi 0, %s98
      %s118 = sphi 0, %s118
      %s120 = sphi 0, %s118
      %s121 = sphi 0, %s120
      %s135 = sphi 0, %s121
    $region4: #{tpu_custom_call.1} parent=1 // loop_header_branch
      %19 = sbr.rel (%p17) target = $region8
    $region5: #{tpu_custom_call.1} parent=1 // loop_body
      %s21 = ssub.s32 %s16, 1
      %s22 = ssub.s32 %s16, 2
      %s23 = sadd.s32 %s16, 1
      %s25 = sadd.s32 %s24, 1
      %p28 = scmp.eq.s32.totalorder %s16, 3
      %p29 = scmp.ne.s32.totalorder %s24, %s26
      %p30 = scmp.eq.s32.totalorder %s16, 0
      %p31 = por %p29, %p30
      %p32 = scmp.ne.s32.totalorder %s24, %s26
      %p33 = scmp.eq.s32.totalorder %s21, 3
      %p34 = por %p32, %p33
      %p35 = scmp.ne.s32.totalorder %s26, %s27
      %p36 = scmp.eq.s32.totalorder %s21, 0
      %p37 = por %p35, %p36
      %p38 = scmp.ne.s32.totalorder %s26, %s27
      %p39 = scmp.eq.s32.totalorder %s22, 3
      %p40 = por %p38, %p39
      %p42 = scmp.ne.s32.totalorder %s27, %s41
      %p43 = scmp.eq.s32.totalorder %s22, 0
      %p44 = por %p42, %p43
      %s46 = sadd.s32 %s45, 1
      %p49 = scmp.eq.s32.totalorder %s16, 3
      %p50 = scmp.ne.s32.totalorder %s45, %s47
      %p51 = scmp.eq.s32.totalorder %s16, 0
      %p52 = por %p50, %p51
      %p53 = scmp.ne.s32.totalorder %s45, %s47
      %p54 = scmp.eq.s32.totalorder %s21, 3
      %p55 = por %p53, %p54
      %p56 = scmp.ne.s32.totalorder %s47, %s48
      %p57 = scmp.eq.s32.totalorder %s21, 0
      %p58 = por %p56, %p57
      %p59 = scmp.ne.s32.totalorder %s47, %s48
      %p60 = scmp.eq.s32.totalorder %s22, 3
      %p61 = por %p59, %p60
      %p63 = scmp.ne.s32.totalorder %s48, %s62
      %p64 = scmp.eq.s32.totalorder %s22, 0
      %p65 = por %p63, %p64
      %s66 = ssub.s32 %s16, %s23
      %p67 = scmp.eq.s32.totalorder %s66, 0
      %s69 = sadd.s32 %s68, 1
      %s70 = scalar_select %p67, %s68, %s69
      %p73 = pneg %p67
      %p74 = scmp.eq.s32.totalorder %s16, 3
      %p75 = por %p73, %p74
      %p76 = scmp.ne.s32.totalorder %s68, %s71
      %p77 = scmp.eq.s32.totalorder %s16, 0
      %p78 = por %p76, %p77
      %p79 = scmp.ne.s32.totalorder %s68, %s71
      %p80 = scmp.eq.s32.totalorder %s21, 3
      %p81 = por %p79, %p80
      %p82 = scmp.ne.s32.totalorder %s71, %s72
      %p83 = scmp.eq.s32.totalorder %s21, 0
      %p84 = por %p82, %p83
      %p85 = scmp.ne.s32.totalorder %s71, %s72
      %p86 = scmp.eq.s32.totalorder %s22, 3
      %p87 = por %p85, %p86
      %p89 = scmp.ne.s32.totalorder %s72, %s88
      %p90 = scmp.eq.s32.totalorder %s22, 0
      %p91 = por %p89, %p90
      %s92 = ssub.s32 %s16, %s23
      %p93 = scmp.eq.s32.totalorder %s92, 0
      %s95 = sadd.s32 %s94, 1
      %s96 = scalar_select %p93, %s94, %s95
      %p99 = pneg %p93
      %p100 = scmp.eq.s32.totalorder %s16, 3
      %p101 = por %p99, %p100
      %p102 = scmp.ne.s32.totalorder %s94, %s97
      %p103 = scmp.eq.s32.totalorder %s16, 0
      %p104 = por %p102, %p103
      %p105 = scmp.ne.s32.totalorder %s94, %s97
      %p106 = scmp.eq.s32.totalorder %s21, 3
      %p107 = por %p105, %p106
      %p108 = scmp.ne.s32.totalorder %s97, %s98
      %p109 = scmp.eq.s32.totalorder %s21, 0
      %p110 = por %p108, %p109
      %p111 = scmp.ne.s32.totalorder %s97, %s98
      %p112 = scmp.eq.s32.totalorder %s22, 3
      %p113 = por %p111, %p112
      %p115 = scmp.ne.s32.totalorder %s98, %s114
      %p116 = scmp.eq.s32.totalorder %s22, 0
      %p117 = por %p115, %p116
      %s119 = sadd.s32 %s118, 1
      %p122 = scmp.eq.s32.totalorder %s16, 3
      %p123 = scmp.ne.s32.totalorder %s118, %s120
      %p124 = scmp.eq.s32.totalorder %s16, 0
      %p125 = por %p123, %p124
      %p126 = scmp.ne.s32.totalorder %s118, %s120
      %p127 = scmp.eq.s32.totalorder %s21, 3
      %p128 = por %p126, %p127
      %p129 = scmp.ne.s32.totalorder %s120, %s121
      %p130 = scmp.eq.s32.totalorder %s21, 0
      %p131 = por %p129, %p130
      %p132 = scmp.ne.s32.totalorder %s120, %s121
      %p133 = scmp.eq.s32.totalorder %s22, 3
      %p134 = por %p132, %p133
      %p136 = scmp.ne.s32.totalorder %s121, %s135
      %p137 = scmp.eq.s32.totalorder %s22, 0
      %p138 = por %p136, %p137
      %p139 = scmp.le.s32.totalorder 1, %s16
      %p140 = scmp.lt.s32.totalorder %s16, 5
      %p141 = pnand %p139, %p140
      %p142 = pneg %p141
      // Predicated region
      $region9: #{tpu_custom_call.1} parent=5 // pred_check
        _
      $region10: #{tpu_custom_call.1} parent=5 // pred_check_branch
        %144 = sbr.rel (%p141) target = $region12
      $region11: #{tpu_custom_call.1} parent=5 // pred_region
        %s145 = ssub.s32 %s16, 1
        // Predicated region
        $region13: #{tpu_custom_call.1} parent=11 // pred_check
          %p146 = pneg %p37
        $region14: #{tpu_custom_call.1} parent=11 // pred_check_branch
          %148 = sbr.rel (%p146) target = $region16
        $region15: #{tpu_custom_call.1} parent=11 // pred_region
          _
        $region16: #{tpu_custom_call.1} parent=11 // pred_fallthru
          _
        // Predicated region
        $region17: #{tpu_custom_call.1} parent=11 // pred_check
          %p149 = pneg %p58
        $region18: #{tpu_custom_call.1} parent=11 // pred_check_branch
          %151 = sbr.rel (%p149) target = $region20
        $region19: #{tpu_custom_call.1} parent=11 // pred_region
          %s153 = ssub.s32 256, 256
          %154 = vsyncadd [#allocation5], %s153
          %s156 = sshll.u32 [#allocation4], 4
          %s157 = int_to_ptr.vmem [resolvable:$true] %s156
          %159 = dma.hbm_to_vmem [thread:$0]  %s1, 256, %s157, [#allocation5]
        $region20: #{tpu_custom_call.1} parent=11 // pred_fallthru
          _
      $region12: #{tpu_custom_call.1} parent=5 // pred_fallthru
        _
      %p160 = scmp.lt.s32.totalorder %s16, 4
      // Predicated region
      $region21: #{tpu_custom_call.1} parent=5 // pred_check
        %p161 = pneg %p160
      $region22: #{tpu_custom_call.1} parent=5 // pred_check_branch
        %163 = sbr.rel (%p161) target = $region24
      $region23: #{tpu_custom_call.1} parent=5 // pred_region
        // Predicated region
        $region25: #{tpu_custom_call.1} parent=23 // pred_check
          %p164 = pneg %p78
        $region26: #{tpu_custom_call.1} parent=23 // pred_check_branch
          %166 = sbr.rel (%p164) target = $region28
        $region27: #{tpu_custom_call.1} parent=23 // pred_region
          %s167 = sand.u32 %s16, 1
          %s168 = scalar_lea.sflag [#allocation8], %s167
          %s169 = sand.u32 %s68, 1
          %s170 = smul.addr %s169, 8
          %s171 = scalar_lea.vmem [#allocation7], %s170
          %s173 = ssub.s32 128, 128
          %174 = vsyncadd %s168, %s173
          %s175 = smul.addr %s16, 128
          %s176 = scalar_lea.hbm %s2, %s175
          %s178 = sshll.u32 %s171, 4
          %s179 = int_to_ptr.vmem [resolvable:$true] %s178
          %181 = dma.hbm_to_vmem [thread:$0]  %s176, 128, %s179, %s168
        $region28: #{tpu_custom_call.1} parent=23 // pred_fallthru
          _
        // Predicated region
        $region29: #{tpu_custom_call.1} parent=23 // pred_check
          %p182 = pneg %p104
        $region30: #{tpu_custom_call.1} parent=23 // pred_check_branch
          %184 = sbr.rel (%p182) target = $region32
        $region31: #{tpu_custom_call.1} parent=23 // pred_region
          %s185 = sand.u32 %s16, 1
          %s186 = scalar_lea.sflag [#allocation8], %s185
          %s187 = sand.u32 %s94, 1
          %s188 = smul.addr %s187, 128
          %s189 = scalar_lea.vmem [#allocation9], %s188
          %s190 = smul.u32 16, %s16
          %s192 = ssub.s32 2048, 2048
          %193 = vsyncadd %s186, %s192
          %s194 = smul.addr %s190, 2
          %s195 = smul.addr %s194, 64
          %s196 = scalar_lea.hbm %s3, %s195
          %s197 = sshll.u32 %s189, 4
          %s198 = int_to_ptr.vmem [resolvable:$true] %s197
          %203 = dma.hbm_to_vmem [thread:$0]  %s196, 2048, %s198, %s186, 128, 128, 8
        $region32: #{tpu_custom_call.1} parent=23 // pred_fallthru
          _
      $region24: #{tpu_custom_call.1} parent=5 // pred_fallthru
        _
      %p204 = scmp.le.s32.totalorder 1, %s16
      %p205 = scmp.lt.s32.totalorder %s16, 5
      %p206 = pnand %p204, %p205
      %p207 = pneg %p206
      // Predicated region
      $region33: #{tpu_custom_call.1} parent=5 // pred_check
        _
      $region34: #{tpu_custom_call.1} parent=5 // pred_check_branch
        %209 = sbr.rel (%p206) target = $region36
      $region35: #{tpu_custom_call.1} parent=5 // pred_region
        %s210 = ssub.s32 %s16, 1
        // Predicated region
        $region37: #{tpu_custom_call.1} parent=35 // pred_check
          %p211 = pneg %p58
        $region38: #{tpu_custom_call.1} parent=35 // pred_check_branch
          %213 = sbr.rel (%p211) target = $region40
        $region39: #{tpu_custom_call.1} parent=35 // pred_region
          %214 = dma.done [#allocation5], 256
        $region40: #{tpu_custom_call.1} parent=35 // pred_fallthru
          _
        %s215 = sand.u32 %s21, 1
        %s216 = scalar_lea.sflag [#allocation8], %s215
        %s217 = sand.u32 %s71, 1
        %s218 = smul.addr %s217, 8
        %s219 = scalar_lea.vmem [#allocation7], %s218
        // Predicated region
        $region41: #{tpu_custom_call.1} parent=35 // pred_check
          %p220 = pneg %p84
        $region42: #{tpu_custom_call.1} parent=35 // pred_check_branch
          %222 = sbr.rel (%p220) target = $region44
        $region43: #{tpu_custom_call.1} parent=35 // pred_region
          %223 = dma.done %s216, 128
        $region44: #{tpu_custom_call.1} parent=35 // pred_fallthru
          _
        %s224 = sand.u32 %s21, 1
        %s225 = scalar_lea.sflag [#allocation8], %s224
        %s226 = sand.u32 %s97, 1
        %s227 = smul.addr %s226, 128
        %s228 = scalar_lea.vmem [#allocation9], %s227
        // Predicated region
        $region45: #{tpu_custom_call.1} parent=35 // pred_check
          %p229 = pneg %p110
        $region46: #{tpu_custom_call.1} parent=35 // pred_check_branch
          %231 = sbr.rel (%p229) target = $region48
        $region47: #{tpu_custom_call.1} parent=35 // pred_region
          %232 = dma.done %s225, 2048
        $region48: #{tpu_custom_call.1} parent=35 // pred_fallthru
          _
        %p233 = pneg %p37
        %p234 = pneg %p34
        %p235 = pneg %p58
        %p236 = pneg %p55
        %s237 = sand.u32 %s21, 1
        %s238 = scalar_lea.sflag [#allocation8], %s237
        %s239 = sand.u32 %s71, 1
        %s240 = smul.addr %s239, 8
        %s241 = scalar_lea.vmem [#allocation7], %s240
        %p242 = pneg %p84
        %p243 = pneg %p81
        %s244 = sand.u32 %s21, 1
        %s245 = scalar_lea.sflag [#allocation8], %s244
        %s246 = sand.u32 %s97, 1
        %s247 = smul.addr %s246, 128
        %s248 = scalar_lea.vmem [#allocation9], %s247
        %p249 = pneg %p110
        %p250 = pneg %p107
        %p251 = pneg %p131
        %p252 = pneg %p128
        %s253 = smul.u32 16, %s21
        %p255 = scmp.eq.s32.totalorder %s21, 0
        // Predicated region
        $region49: #{tpu_custom_call.1} parent=35 // pred_check
          %p256 = pneg %p255
        $region50: #{tpu_custom_call.1} parent=35 // pred_check_branch
          %258 = sbr.rel (%p256) target = $region52
        $region51: #{tpu_custom_call.1} parent=35 // pred_region
          %259 = vst [vmem:[#allocation2] sm:$0xff] 0.0
          %260 = vst [vmem:[#allocation2 + $0x8] sm:$0xff] 0.0
        $region52: #{tpu_custom_call.1} parent=35 // pred_fallthru
          _
        %v261 = vld [vmem:[#allocation4] sm:$0xff]
        %v262 = vld [vmem:[#allocation4 + $0x8] sm:$0xff]
        %v263 = vld [vmem:[%s228] sm:$0xff]
        %v264 = vld [vmem:[%s228 + $0x8] sm:$0xff]
        %v265 = vld [vmem:[%s228 + $0x10] sm:$0xff]
        %v266 = vld [vmem:[%s228 + $0x18] sm:$0xff]
        %v267 = vld [vmem:[%s228 + $0x20] sm:$0xff]
        %v268 = vld [vmem:[%s228 + $0x28] sm:$0xff]
        %v269 = vld [vmem:[%s228 + $0x30] sm:$0xff]
        %v270 = vld [vmem:[%s228 + $0x38] sm:$0xff]
        %v271 = vld [vmem:[%s228 + $0x40] sm:$0xff]
        %v272 = vld [vmem:[%s228 + $0x48] sm:$0xff]
        %v273 = vld [vmem:[%s228 + $0x50] sm:$0xff]
        %v274 = vld [vmem:[%s228 + $0x58] sm:$0xff]
        %v275 = vld [vmem:[%s228 + $0x60] sm:$0xff]
        %v276 = vld [vmem:[%s228 + $0x68] sm:$0xff]
        %v277 = vld [vmem:[%s228 + $0x70] sm:$0xff]
        %v278 = vld [vmem:[%s228 + $0x78] sm:$0xff]
        %v279 = vpack.c.bf16 %v261, %v261
        %v280 = vpack.c.bf16 %v262, %v262
        %v297 = vunpack.c.l.b16 %v263
        %v298 = vunpack.c.h.b16 %v263
        %v299 = vunpack.c.l.b16 %v264
        %v300 = vunpack.c.h.b16 %v264
        %v301 = vunpack.c.l.b16 %v265
        %v302 = vunpack.c.h.b16 %v265
        %v303 = vunpack.c.l.b16 %v266
        %v304 = vunpack.c.h.b16 %v266
        %v305 = vunpack.c.l.b16 %v267
        %v306 = vunpack.c.h.b16 %v267
        %v307 = vunpack.c.l.b16 %v268
        %v308 = vunpack.c.h.b16 %v268
        %v309 = vunpack.c.l.b16 %v269
        %v310 = vunpack.c.h.b16 %v269
        %v311 = vunpack.c.l.b16 %v270
        %v312 = vunpack.c.h.b16 %v270
        %v313 = vunpack.c.l.b16 %v271
        %v314 = vunpack.c.h.b16 %v271
        %v315 = vunpack.c.l.b16 %v272
        %v316 = vunpack.c.h.b16 %v272
        %v317 = vunpack.c.l.b16 %v273
        %v318 = vunpack.c.h.b16 %v273
        %v319 = vunpack.c.l.b16 %v274
        %v320 = vunpack.c.h.b16 %v274
        %v321 = vunpack.c.l.b16 %v275
        %v322 = vunpack.c.h.b16 %v275
        %v323 = vunpack.c.l.b16 %v276
        %v324 = vunpack.c.h.b16 %v276
        %v325 = vunpack.c.l.b16 %v277
        %v326 = vunpack.c.h.b16 %v277
        %v327 = vunpack.c.l.b16 %v278
        %v328 = vunpack.c.h.b16 %v278
        %v329 = vpack.c.b16 %v299, %v297
        %v330 = vpack.c.b16 %v300, %v298
        %v331 = vpack.c.b16 %v303, %v301
        %v332 = vpack.c.b16 %v304, %v302
        %v333 = vpack.c.b16 %v307, %v305
        %v334 = vpack.c.b16 %v308, %v306
        %v335 = vpack.c.b16 %v311, %v309
        %v336 = vpack.c.b16 %v312, %v310
        %v337 = vpack.c.b16 %v315, %v313
        %v338 = vpack.c.b16 %v316, %v314
        %v339 = vpack.c.b16 %v319, %v317
        %v340 = vpack.c.b16 %v320, %v318
        %v341 = vpack.c.b16 %v323, %v321
        %v342 = vpack.c.b16 %v324, %v322
        %v343 = vpack.c.b16 %v327, %v325
        %v344 = vpack.c.b16 %v328, %v326
        %361 = vmatprep.subr.bf16.mxu0 %v344
        %362 = vmatpush1.bf16.xpose.msra.mxu0 %v343
        %363 = vmatprep.subr.bf16.mxu0 %v342
        %364 = vmatpush1.bf16.xpose.msra.mxu0 %v341
        %365 = vmatprep.subr.bf16.mxu0 %v340
        %366 = vmatpush1.bf16.xpose.msra.mxu0 %v339
        %367 = vmatprep.subr.bf16.mxu0 %v338
        %368 = vmatpush1.bf16.xpose.msra.mxu0 %v337
        %369 = vmatprep.subr.bf16.mxu0 %v336
        %370 = vmatpush1.bf16.xpose.msra.mxu0 %v335
        %371 = vmatprep.subr.bf16.mxu0 %v334
        %372 = vmatpush1.bf16.xpose.msra.mxu0 %v333
        %373 = vmatprep.subr.bf16.mxu0 %v332
        %374 = vmatpush1.bf16.xpose.msra.mxu0 %v331
        %375 = vmatprep.subr.bf16.mxu0 %v330
        %376 = vmatpush1.bf16.xpose.msra.mxu0 %v329
        %377 = vmatprep.subr.bf16.mxu0 0
        %378 = vmatpush2.bf16.xpose.msra.mxu0 0
        %379 = vmatprep.subr.bf16.mxu0 0
        %380 = vmatpush2.bf16.xpose.msra.mxu0 0
        %381 = vmatprep.subr.bf16.mxu0 0
        %382 = vmatpush2.bf16.xpose.msra.mxu0 0
        %383 = vmatprep.subr.bf16.mxu0 0
        %384 = vmatpush2.bf16.xpose.msra.mxu0 0
        %385 = vmatprep.subr.bf16.mxu0 0
        %386 = vmatpush2.bf16.xpose.msra.mxu0 0
        %387 = vmatprep.subr.bf16.mxu0 0
        %388 = vmatpush2.bf16.xpose.msra.mxu0 0
        %389 = vmatprep.subr.bf16.mxu0 0
        %390 = vmatpush2.bf16.xpose.msra.mxu0 0
        %391 = vmatprep.subr.bf16.mxu0 0
        %392 = vmatpush2.bf16.xpose.msra.mxu0 0
        %393 = vmatprep.mubr.bf16.mxu0 %v280
        %394 = vmatmul.mubr.bf16.gmra.mxu0 %v279
        %v395 = vpop.f32.mrf.mxu0
        %v396 = vadd.f32 0.0, %v395
        %v397 = vpop.f32.mrf.mxu0
        %v398 = vpop.f32.mrf.mxu0
        %v399 = vpop.f32.mrf.mxu0
        %400 = vdwg.mxu0
        %v401 = vld [vmem:[%s219] sm:$0xff]
        %v402 = vsub.f32 %v396, %v401
        %v403 = vld [vmem:[#allocation2] sm:$0xff]
        %v404 = vld [vmem:[#allocation2 + $0x8] sm:$0xff]
        %v405 = vpack.c.bf16 %v402, %v402
        %406 = vmatprep.subr.bf16.mxu0 %v344
        %407 = vmatpush1.bf16.msra.mxu0 %v343
        %408 = vmatprep.subr.bf16.mxu0 %v342
        %409 = vmatpush1.bf16.msra.mxu0 %v341
        %410 = vmatprep.subr.bf16.mxu0 %v340
        %411 = vmatpush1.bf16.msra.mxu0 %v339
        %412 = vmatprep.subr.bf16.mxu0 %v338
        %413 = vmatpush1.bf16.msra.mxu0 %v337
        %414 = vmatprep.subr.bf16.mxu0 %v336
        %415 = vmatpush1.bf16.msra.mxu0 %v335
        %416 = vmatprep.subr.bf16.mxu0 %v334
        %417 = vmatpush1.bf16.msra.mxu0 %v333
        %418 = vmatprep.subr.bf16.mxu0 %v332
        %419 = vmatpush1.bf16.msra.mxu0 %v331
        %420 = vmatprep.subr.bf16.mxu0 %v330
        %421 = vmatpush1.bf16.msra.mxu0 %v329
        %422 = vmatprep.subr.bf16.mxu0 0
        %423 = vmatpush2.bf16.msra.mxu0 0
        %424 = vmatprep.subr.bf16.mxu0 0
        %425 = vmatpush2.bf16.msra.mxu0 0
        %426 = vmatprep.subr.bf16.mxu0 0
        %427 = vmatpush2.bf16.msra.mxu0 0
        %428 = vmatprep.subr.bf16.mxu0 0
        %429 = vmatpush2.bf16.msra.mxu0 0
        %430 = vmatprep.subr.bf16.mxu0 0
        %431 = vmatpush2.bf16.msra.mxu0 0
        %432 = vmatprep.subr.bf16.mxu0 0
        %433 = vmatpush2.bf16.msra.mxu0 0
        %434 = vmatprep.subr.bf16.mxu0 0
        %435 = vmatpush2.bf16.msra.mxu0 0
        %436 = vmatprep.subr.bf16.mxu0 0
        %437 = vmatpush2.bf16.msra.mxu0 0
        %438 = vmatprep.mubr.bf16.mxu0 0
        %439 = vmatmul.mubr.bf16.gmra.mxu0 %v405
        %v440 = vpop.f32.mrf.mxu0
        %v441 = vadd.f32 0.0, %v440
        %v442 = vpop.f32.mrf.mxu0
        %v443 = vadd.f32 0.0, %v442
        %v444 = vpop.f32.mrf.mxu0
        %v445 = vpop.f32.mrf.mxu0
        %446 = vdwg.mxu0
        %v447 = vadd.f32 %v403, %v441
        %v448 = vadd.f32 %v404, %v443
        %449 = vst [vmem:[#allocation2] sm:$0xff] %v447
        %450 = vst [vmem:[#allocation2 + $0x8] sm:$0xff] %v448
        %p451 = scmp.eq.s32.totalorder %s21, 3
        // Predicated region
        $region53: #{tpu_custom_call.1} parent=35 // pred_check
          %p452 = pneg %p451
        $region54: #{tpu_custom_call.1} parent=35 // pred_check_branch
          %454 = sbr.rel (%p452) target = $region56
        $region55: #{tpu_custom_call.1} parent=35 // pred_region
          %s455 = sld [smem:[#allocation3]]
          %v456 = vld [vmem:[#allocation2] sm:$0xff]
          %v457 = vld [vmem:[#allocation2 + $0x8] sm:$0xff]
          %v458 = vstv %s455
          %v459 = vmul.f32 %v458, %v456
          %v460 = vmul.f32 %v458, %v457
          %v461 = vsub.f32 %v261, %v459
          %v462 = vsub.f32 %v262, %v460
          %463 = vst [vmem:[#allocation10] sm:$0xff] %v461
          %464 = vst [vmem:[#allocation10 + $0x8] sm:$0xff] %v462
        $region56: #{tpu_custom_call.1} parent=35 // pred_fallthru
          _
        // Predicated region
        $region57: #{tpu_custom_call.1} parent=35 // pred_check
          %p465 = pneg %p128
        $region58: #{tpu_custom_call.1} parent=35 // pred_check_branch
          %467 = sbr.rel (%p465) target = $region60
        $region59: #{tpu_custom_call.1} parent=35 // pred_region
          %s469 = ssub.s32 256, 256
          %470 = vsyncadd [#allocation6], %s469
          %s472 = sshll.u32 [#allocation10], 4
          %s473 = int_to_ptr.vmem [resolvable:$true] %s472
          %475 = dma.vmem_to_hbm [thread:$0]  %s473, 256, %s4, [#allocation6]
        $region60: #{tpu_custom_call.1} parent=35 // pred_fallthru
          _
        // Predicated region
        $region61: #{tpu_custom_call.1} parent=35 // pred_check
          %p476 = pneg %p128
        $region62: #{tpu_custom_call.1} parent=35 // pred_check_branch
          %478 = sbr.rel (%p476) target = $region64
        $region63: #{tpu_custom_call.1} parent=35 // pred_region
          %479 = dma.done [#allocation6], 256
        $region64: #{tpu_custom_call.1} parent=35 // pred_fallthru
          _
      $region36: #{tpu_custom_call.1} parent=5 // pred_fallthru
        _
      %p480 = scmp.le.s32.totalorder 2, %s16
      // Predicated region
      $region65: #{tpu_custom_call.1} parent=5 // pred_check
        %p481 = pneg %p480
      $region66: #{tpu_custom_call.1} parent=5 // pred_check_branch
        %483 = sbr.rel (%p481) target = $region68
      $region67: #{tpu_custom_call.1} parent=5 // pred_region
        %s484 = ssub.s32 %s16, 2
      $region68: #{tpu_custom_call.1} parent=5 // pred_fallthru
        _
    $region6: #{tpu_custom_call.1} parent=1 // loop_footer
      %s20 = sadd.s32 1, %s16
    $region7: #{tpu_custom_call.1} parent=1 // loop_footer_branch
      %15 = sbr.rel target = $region3
    $region8: #{tpu_custom_call.1} parent=1 // loop_exit
      _
    %485 = vsyncpa [#allocation5], 1
    %s486 = scalar_lea.sflag [#allocation5], 1
    %487 = vsyncpa %s486, 1
    %488 = vsyncpa [#allocation8], 1
    %s489 = scalar_lea.sflag [#allocation8], 1
    %490 = vsyncpa %s489, 1
    %491 = vsyncpa [#allocation6], 1
    %s492 = scalar_lea.sflag [#allocation6], 1
    %493 = vsyncpa %s492, 1

</llo_original>
